<compile_context>
chip_gen: v7x
topology: tpu7x:2x2x1
jax: 0.10.0
libtpu: 0.0.40
codegen_flags: <defaults>
</compile_context>

<pallas_src>
import jax
import jax.numpy as jnp
from jax.experimental import pallas as pl
from jax.experimental.pallas import tpu as pltpu

_LANES = 128
_MAX_COLS = 4096
# 3 MiB per block: 4 live buffers (in + out, double-buffered) = 12 MiB,
# safely under v5e's 16 MiB default scoped VMEM and fine on v6e/v7x.
_MAX_BLOCK_BYTES = 3 * 1024 * 1024
_WORD = 4  # bytes per 32-bit lane element


def _copy_kernel(x_ref, o_ref):
    # Pure pass-through: load the current lane-dense tile and store it.
    o_ref[...] = x_ref[...]


def _pick_block_rows(rows: int, cols: int) -> int:
    """Largest row-block (multiple of 8, preferring divisors of `rows`)
    that fits the per-block VMEM budget."""
    max_rows = _MAX_BLOCK_BYTES // (cols * _WORD)
    if rows <= max(max_rows, 1):
        return rows  # whole array in a single block
    max_rows = max(8, (max_rows // 8) * 8)
    # Prefer a divisor of rows so the last grid step is a full block.
    for cand in range(max_rows, 0, -8):
        if rows % cand == 0:
            return cand
    return max_rows  # fall back: Pallas handles the (masked) tail block


def _pallas_identity_copy(x: jax.Array) -> jax.Array:
    """Identity implemented as a Pallas TPU copy kernel (demonstration path)."""
    orig_shape, orig_dtype = x.shape, x.dtype
    itemsize = x.dtype.itemsize
    total_bytes = x.size * itemsize

    if x.size == 0 or itemsize > _WORD or total_bytes % (_WORD * _LANES) != 0:
        # Not 32-bit-lane alignable without padding; the reference op has no
        # compute anyway, so use the zero-cost identity instead.
        return x

    # Reinterpret the flat payload as 32-bit words so any dtype copies with
    # the plain (8, 128) tile and unmasked full-width stores.
    flat = x.reshape(-1)
    if itemsize == _WORD:
        words = jax.lax.bitcast_convert_type(flat, jnp.uint32)
    else:
        per = _WORD // itemsize
        words = jax.lax.bitcast_convert_type(flat.reshape(-1, per), jnp.uint32)

    total_words = words.size
    # Lane-dense 2D view: grow cols to the largest power-of-two multiple of
    # 128 (capped at 4096) that divides the total word count.
    cols = _LANES
    while cols * 2 <= _MAX_COLS and total_words % (cols * 2) == 0:
        cols *= 2
    rows = total_words // cols
    x2d = words.reshape(rows, cols)

    block_rows = _pick_block_rows(rows, cols)
    grid = (pl.cdiv(rows, block_rows),)

    out2d = pl.pallas_call(
        _copy_kernel,
        out_shape=jax.ShapeDtypeStruct((rows, cols), jnp.uint32),
        grid=grid,
        in_specs=[pl.BlockSpec((block_rows, cols), lambda i: (i, 0))],
        out_specs=pl.BlockSpec((block_rows, cols), lambda i: (i, 0)),
        compiler_params=pltpu.CompilerParams(
            dimension_semantics=("parallel",),
        ),
    )(x2d)

    out_flat = jax.lax.bitcast_convert_type(out2d.reshape(-1), orig_dtype)
    return out_flat.reshape(orig_shape)


def your_model_forward(x: jax.Array, *, use_pallas: bool = False) -> jax.Array:
    """Pallas equivalent of YourModel.forward.

    The reference forward() has an empty body, so the default path performs
    the identity with zero cost (no kernel launch, no HBM traffic).  Set
    use_pallas=True to route through the Pallas copy kernel instead.
    """
    if use_pallas:
        return _pallas_identity_copy(x)
    # Elided launch: nothing to compute, return the input unchanged.
    return x


if __name__ == "__main__":
    import numpy as np

    key = jax.random.PRNGKey(0)
    # Small NCHW input consistent with a generic vision-style module.
    x = jax.random.normal(key, (2, 4, 16, 16), dtype=jnp.float32)
    x_np = np.asarray(x)

    # Default (optimized) path: no kernel launch at all.
    fast = jax.block_until_ready(your_model_forward(x))

    # Exercise the Pallas copy kernel once to validate it on-device.
    out = jax.block_until_ready(your_model_forward(x, use_pallas=True))

    assert fast.shape == x_np.shape and fast.dtype == x.dtype
    assert out.shape == x_np.shape and out.dtype == x.dtype
    assert np.array_equal(np.asarray(fast), x_np)
    assert np.array_equal(np.asarray(out), x_np)

    print("KERNEL_OK")
</pallas_src>

<mosaic_0001>
module attributes {stable_mosaic.version = 11 : i64} {
  func.func @_copy_kernel(%arg0: i32, %arg1: memref<1x2048xi32, #tpu.memory_space<vmem>>, %arg2: memref<1x2048xi32, #tpu.memory_space<vmem>>) attributes {dimension_semantics = [#tpu.dimension_semantics<parallel>], iteration_bounds = array<i64: 1>, scalar_prefetch = 0 : i64, scratch_operands = 0 : i64, tpu.core_type = #tpu.core_type<tc>, window_params = [{transform_indices = @transform_0, window_bounds = array<i64: 1, 2048>}, {transform_indices = @transform_1, window_bounds = array<i64: 1, 2048>}]} {
    %c0 = arith.constant 0 : index
    %c0_0 = arith.constant 0 : index
    %0 = vector.load %arg1[%c0, %c0_0] : memref<1x2048xi32, #tpu.memory_space<vmem>>, vector<1x2048xi32>
    %c0_1 = arith.constant 0 : index
    %c0_2 = arith.constant 0 : index
    %1 = vector.load %arg2[%c0_1, %c0_2] : memref<1x2048xi32, #tpu.memory_space<vmem>>, vector<1x2048xi32>
    tpu.vector_store %arg2[%c0_1, %c0_2], %0 {strides = array<i32>} : memref<1x2048xi32, #tpu.memory_space<vmem>>, vector<1x2048xi32>,
    return
  }
  func.func @transform_0(%arg0: i32) -> (i32, i32) {
    %c0_i32 = arith.constant 0 : i32
    %c0_i32_0 = arith.constant 0 : i32
    return %arg0, %c0_i32 : i32, i32
  }
  func.func @transform_1(%arg0: i32) -> (i32, i32) {
    %c0_i32 = arith.constant 0 : i32
    %c0_i32_0 = arith.constant 0 : i32
    return %arg0, %c0_i32 : i32, i32
  }
}

</mosaic_0001>

<llo_original>
// kernel: tpu_custom_call.1
$region0: #{tpu_custom_call.1}
  #allocation0 [shape = 'u32[]', space=smem, size = 0x4, offset = 0x4, fixed_abs, tag = 'smem constant byte address 0x4 - core index']
  #allocation1 [shape = 'u32[144,128]{1,0:T(1,128)}', space=vmem, size = 0x12000, scoped, tag = 'internal scratch']
  %s0 = inlined_call_operand.hbm [shape: u32[1,2048], index: 0, kind: input, shape index: {}]
  %s1 = inlined_call_operand.hbm [shape: u32[1,2048], index: 1, kind: output, shape index: {}]
  %s2 = sld [smem:[#allocation0]]
  $region18: #{tpu_custom_call.1} parent=0
    _
  %s4 = ssub.s32 1, %s2
  %s5 = scalar_select 0, %s4, %s2
  $region1: #{tpu_custom_call.1} parent=0
    #allocation2 [shape = 'u8[8192]{0}', space=vmem, size = 0x2000, scoped, tag = 'input window, operand 0, single buffered']
    #allocation3 [shape = 's32[1]{0}', space=sflag, size = 0x4, scoped, tag = 'scoped memory for tpu_custom_call.1']
    #allocation4 [shape = 's32[1]{0}', space=sflag, size = 0x4, scoped, tag = 'scoped memory for tpu_custom_call.1']
    #allocation5 [shape = 'u8[8192]{0}', space=vmem, size = 0x2000, scoped, tag = 'output window, operand 0, single buffered']
    %6 = vsyncpa [#allocation3], 0
    %7 = vsyncpa [#allocation4], 0
    // Predicated region
    $region2: #{tpu_custom_call.1} parent=1 // pred_check
      _
    $region3: #{tpu_custom_call.1} parent=1 // pred_check_branch
      %9 = sbr.rel (0) target = $region5
    $region4: #{tpu_custom_call.1} parent=1 // pred_region
      %s11 = ssub.s32 256, 256
      %12 = vsyncadd [#allocation3], %s11
      %s14 = sshll.u32 [#allocation2], 4
      %s15 = int_to_ptr.vmem [resolvable:$true] %s14
      %17 = dma.hbm_to_vmem [thread:$0]  %s0, 256, %s15, [#allocation3]
    $region5: #{tpu_custom_call.1} parent=1 // pred_fallthru
      _
    // Predicated region
    $region6: #{tpu_custom_call.1} parent=1 // pred_check
      _
    $region7: #{tpu_custom_call.1} parent=1 // pred_check_branch
      %19 = sbr.rel (0) target = $region9
    $region8: #{tpu_custom_call.1} parent=1 // pred_region
      %20 = dma.done [#allocation3], 256
    $region9: #{tpu_custom_call.1} parent=1 // pred_fallthru
      _
    %v21 = vld [vmem:[#allocation2] sm:$0xff]
    %v22 = vld [vmem:[#allocation2 + $0x8] sm:$0xff]
    %23 = vst [vmem:[#allocation5] sm:$0xff] %v21
    %24 = vst [vmem:[#allocation5 + $0x8] sm:$0xff] %v22
    // Predicated region
    $region10: #{tpu_custom_call.1} parent=1 // pred_check
      _
    $region11: #{tpu_custom_call.1} parent=1 // pred_check_branch
      %26 = sbr.rel (0) target = $region13
    $region12: #{tpu_custom_call.1} parent=1 // pred_region
      %s28 = ssub.s32 256, 256
      %29 = vsyncadd [#allocation4], %s28
      %s31 = sshll.u32 [#allocation5], 4
      %s32 = int_to_ptr.vmem [resolvable:$true] %s31
      %34 = dma.vmem_to_hbm [thread:$0]  %s32, 256, %s1, [#allocation4]
    $region13: #{tpu_custom_call.1} parent=1 // pred_fallthru
      _
    // Predicated region
    $region14: #{tpu_custom_call.1} parent=1 // pred_check
      _
    $region15: #{tpu_custom_call.1} parent=1 // pred_check_branch
      %36 = sbr.rel (0) target = $region17
    $region16: #{tpu_custom_call.1} parent=1 // pred_region
      %37 = dma.done [#allocation4], 256
    $region17: #{tpu_custom_call.1} parent=1 // pred_fallthru
      _
    %38 = vsyncpa [#allocation3], 1
    %39 = vsyncpa [#allocation4], 1

</llo_original>
